<compile_context>
chip_gen: v5e
topology: v5e:2x2
jax: 0.10.0
libtpu: 0.0.40
codegen_flags: <defaults>
</compile_context>

<pallas_src>
import functools

import jax
import jax.numpy as jnp
from jax import lax
from jax.experimental import pallas as pl
from jax.experimental.pallas import tpu as pltpu

_LANES = 128
_NEG_BIG = -1e30  # pre-scaled "norm" for padded rows -> exp(...) == 0 exactly


def _cdiv(a: int, b: int) -> int:
    return -(-a // b)


def _round_up(a: int, b: int) -> int:
    return _cdiv(a, b) * b


def _choose_tile(m: int) -> int:
    """128-aligned square tile; m is padded up to a multiple of it.

    Prefers tiles that minimize worst-TensorCore work on a 2-TC (v7x) chip,
    then padding waste, then larger tiles (fewer grid steps).
    """
    if m <= 256:
        return 128 * _cdiv(m, 128)          # 128 or 256, single block
    best_t, best_key = None, None
    for t in (512, 384, 256):
        n = _cdiv(m, t)                     # row/col blocks after padding
        m_pad = n * t
        per_core = ((n + 1) // 2) * t * m_pad
        key = (per_core, m_pad, -t)
        if best_key is None or key < best_key:
            best_key, best_t = key, t
    return best_t


def _hsic_partials_kernel(xr_ref, xc_ref, yr_ref, yc_ref,
                          nxr_ref, nxc_ref, nyr_ref, nyc_ref,
                          o_ref, rk_ref, rl_ref, rkl_ref, *,
                          use_bf16_exp: bool):
    j = pl.program_id(1)
    n_j = pl.num_programs(1)

    @pl.when(j == 0)
    def _():
        rk_ref[...] = jnp.zeros_like(rk_ref)
        rl_ref[...] = jnp.zeros_like(rl_ref)
        rkl_ref[...] = jnp.zeros_like(rkl_ref)

    def gaussian_block(vr_ref, vc_ref, nr_ref, nc_ref):
        # Column operand is pre-scaled by (2/sigma); norms are pre-scaled by
        # (-1/sigma).  pd = (2/s)<vi,vj> - ||vi||^2/s - ||vj||^2/s  (<= 0).
        gram = lax.dot_general(vr_ref[...], vc_ref[...],
                               (((1,), (1,)), ((), ())),
                               preferred_element_type=jnp.float32)  # (tm, tn)
        pd = gram + nr_ref[...] + nc_ref[...]   # broadcast (tm,1) and (1,tn)
        if use_bf16_exp:
            # EUP bf16 packing on v6e/v7x; accumulation stays f32.
            return jnp.exp(pd.astype(jnp.bfloat16)).astype(jnp.float32)
        return jnp.exp(pd)

    k_blk = gaussian_block(xr_ref, xc_ref, nxr_ref, nxc_ref)
    l_blk = gaussian_block(yr_ref, yc_ref, nyr_ref, nyc_ref)

    # Lane-dense accumulation: plain VPU adds of static 128-lane slices.
    tn = k_blk.shape[1]
    rk = rk_ref[...]
    rl = rl_ref[...]
    rkl = rkl_ref[...]
    for c in range(tn // _LANES):
        csl = slice(c * _LANES, (c + 1) * _LANES)
        kc = k_blk[:, csl]
        lc = l_blk[:, csl]
        rk = rk + kc
        rl = rl + lc
        rkl = rkl + kc * lc
    rk_ref[...] = rk
    rl_ref[...] = rl
    rkl_ref[...] = rkl

    @pl.when(j == n_j - 1)
    def _():
        # Single cross-lane reduce per row block (epilogue only).
        rk_row = jnp.sum(rk_ref[...], axis=1, keepdims=True)   # rowsum(K)
        rl_row = jnp.sum(rl_ref[...], axis=1, keepdims=True)   # rowsum(L)
        s1 = jnp.sum(rkl_ref[...])            # sum(K * L)        (this block)
        s2 = jnp.sum(rk_row * rl_row)         # <rowsum(K), rowsum(L)>
        sk = jnp.sum(rk_row)                  # sum(K)
        sl = jnp.sum(rl_row)                  # sum(L)
        # Pack the 4 partial scalars into a full (8, 128) tile -> unmasked vst.
        row = lax.broadcasted_iota(jnp.int32, (8, _LANES), 0)
        packed = jnp.where(row == 0, s1,
                 jnp.where(row == 1, s2,
                 jnp.where(row == 2, sk,
                 jnp.where(row == 3, sl, 0.0)))).astype(jnp.float32)
        o_ref[...] = packed


def hsic_loss(x, y, s_x=1.5, s_y=1.5, *, tile=None, use_bf16_exp=False):
    m, d_x = x.shape
    m_y, d_y = y.shape
    assert m == m_y, "x and y must share the batch dimension"

    if tile is None:
        tile = _choose_tile(m)
    assert tile % _LANES == 0 and tile > 0
    m_pad = _round_up(m, tile)
    n_blk = m_pad // tile
    pad_n = m_pad - m

    f32 = jnp.float32

    def prep(v, sigma):
        v32 = v.astype(f32)
        d = v.shape[1]
        # Scaled squared norms: -||v||^2 / sigma ; padded rows -> -1e30.
        norms = -jnp.sum(v32 * v32, axis=-1) / sigma                 # (m,)
        norms = jnp.pad(norms, (0, pad_n), constant_values=_NEG_BIG)  # (m_pad,)
        # Row operand (unscaled) and column operand pre-scaled by 2/sigma.
        v_row = jnp.pad(v, ((0, pad_n), (0, 0)))
        v_col = jnp.pad((v32 * (2.0 / sigma)).astype(v.dtype), ((0, pad_n), (0, 0)))
        return (v_row, v_col,
                norms.reshape(m_pad, 1).astype(f32),
                norms.reshape(1, m_pad).astype(f32))

    x_row, x_col, nx_r, nx_c = prep(x, float(s_x))
    y_row, y_col, ny_r, ny_c = prep(y, float(s_y))

    kernel = functools.partial(_hsic_partials_kernel,
                               use_bf16_exp=bool(use_bf16_exp))

    bytes_xy = d_x * x.dtype.itemsize + d_y * y.dtype.itemsize
    cost = pl.CostEstimate(
        flops=int(2 * m_pad * m_pad * (d_x + d_y) + 10 * m_pad * m_pad),
        transcendentals=int(2 * m_pad * m_pad),
        bytes_accessed=int((n_blk + 1) * m_pad * bytes_xy
                           + n_blk * 8 * _LANES * 4),
    )

    partials = pl.pallas_call(
        kernel,
        out_shape=jax.ShapeDtypeStruct((n_blk * 8, _LANES), jnp.float32),
        grid_spec=pltpu.PrefetchScalarGridSpec(
            num_scalar_prefetch=0,
            grid=(n_blk, n_blk),
            in_specs=[
                pl.BlockSpec((tile, d_x), lambda i, j: (i, 0)),   # x rows
                pl.BlockSpec((tile, d_x), lambda i, j: (j, 0)),   # x cols *2/s_x
                pl.BlockSpec((tile, d_y), lambda i, j: (i, 0)),   # y rows
                pl.BlockSpec((tile, d_y), lambda i, j: (j, 0)),   # y cols *2/s_y
                pl.BlockSpec((tile, 1), lambda i, j: (i, 0)),     # -||x_i||^2/s_x
                pl.BlockSpec((1, tile), lambda i, j: (0, j)),     # -||x_j||^2/s_x
                pl.BlockSpec((tile, 1), lambda i, j: (i, 0)),     # -||y_i||^2/s_y
                pl.BlockSpec((1, tile), lambda i, j: (0, j)),     # -||y_j||^2/s_y
            ],
            out_specs=pl.BlockSpec((8, _LANES), lambda i, j: (i, 0)),
            scratch_shapes=[
                pltpu.VMEM((tile, _LANES), jnp.float32),   # lane-dense rowsum(K)
                pltpu.VMEM((tile, _LANES), jnp.float32),   # lane-dense rowsum(L)
                pltpu.VMEM((tile, _LANES), jnp.float32),   # lane-dense rowsum(K*L)
            ],
        ),
        compiler_params=pltpu.CompilerParams(
            dimension_semantics=("parallel", "arbitrary"),
            # Footprint at tile=512 is ~7 MiB; 32 MiB leaves ample headroom
            # and is only half of v7x's 64 MiB per-TensorCore VMEM.
            vmem_limit_bytes=32 * 1024 * 1024,
        ),
        cost_estimate=cost,
    )(x_row, x_col, y_row, y_col, nx_r, nx_c, ny_r, ny_c)

    # Combine per-row-block partials (tiny: n_blk x 4 scalars).
    parts = partials.reshape(n_blk, 8, _LANES)[:, :4, 0]    # (n_blk, 4)
    s1 = jnp.sum(parts[:, 0])
    s2 = jnp.sum(parts[:, 1])
    sk = jnp.sum(parts[:, 2])
    sl = jnp.sum(parts[:, 3])

    numer = s1 - (2.0 / m) * s2 + (sk * sl) / float(m * m)
    return numer / float((m - 1) ** 2)


def _hsic_reference(x, y, s_x=1.5, s_y=1.5):
    """Pure-JAX reference mirroring the PyTorch module."""
    def pd(v):
        n = jnp.sum(v ** 2, -1).reshape((-1, 1))
        return -2.0 * (v @ v.T) + n + n.T

    m = x.shape[0]
    K = jnp.exp(-pd(x) / s_x)
    L = jnp.exp(-pd(y) / s_y)
    H = jnp.eye(m) - jnp.ones((m, m)) / m
    return jnp.trace(L @ (H @ (K @ H))) / (m - 1) ** 2


if __name__ == "__main__":
    key = jax.random.PRNGKey(0)
    kx, ky, kx2, ky2 = jax.random.split(key, 4)

    # Small shape consistent with the module: batch m=8, features 32 / 16.
    m, d_x, d_y = 8, 32, 16
    x = jax.random.normal(kx, (m, d_x), dtype=jnp.float32)
    y = jax.random.normal(ky, (m, d_y), dtype=jnp.float32)

    out = jax.block_until_ready(hsic_loss(x, y, 1.5, 1.5))
    ref = _hsic_reference(x, y, 1.5, 1.5)
    assert jnp.allclose(out, ref, rtol=1e-4, atol=1e-5), (out, ref)

    # Multi-block path: m not a multiple of the tile, exercising padding
    # masks, per-row-block accumulation and the partials combine.  tile=128
    # keeps this test small while producing a (2, 2) grid.
    m2 = 200
    x2 = jax.random.normal(kx2, (m2, d_x), dtype=jnp.float32)
    y2 = jax.random.normal(ky2, (m2, d_y), dtype=jnp.float32)
    out2 = jax.block_until_ready(hsic_loss(x2, y2, 1.5, 1.5, tile=128))
    ref2 = _hsic_reference(x2, y2, 1.5, 1.5)
    assert jnp.allclose(out2, ref2, rtol=1e-4, atol=1e-5), (out2, ref2)

    print("KERNEL_OK")
</pallas_src>

<mosaic_0001>
module attributes {stable_mosaic.version = 11 : i64} {
  func.func @_hsic_partials_kernel(%arg0: i32, %arg1: i32, %arg2: memref<128x32xf32, #tpu.memory_space<vmem>>, %arg3: memref<128x32xf32, #tpu.memory_space<vmem>>, %arg4: memref<128x16xf32, #tpu.memory_space<vmem>>, %arg5: memref<128x16xf32, #tpu.memory_space<vmem>>, %arg6: memref<128x1xf32, #tpu.memory_space<vmem>>, %arg7: memref<1x128xf32, #tpu.memory_space<vmem>>, %arg8: memref<128x1xf32, #tpu.memory_space<vmem>>, %arg9: memref<1x128xf32, #tpu.memory_space<vmem>>, %arg10: memref<8x128xf32, #tpu.memory_space<vmem>>, %arg11: memref<128x128xf32, #tpu.memory_space<vmem>>, %arg12: memref<128x128xf32, #tpu.memory_space<vmem>>, %arg13: memref<128x128xf32, #tpu.memory_space<vmem>>) attributes {dimension_semantics = [#tpu.dimension_semantics<parallel>, #tpu.dimension_semantics<arbitrary>], iteration_bounds = array<i64: 1, 1>, scalar_prefetch = 0 : i64, scratch_operands = 3 : i64, tpu.core_type = #tpu.core_type<tc>, window_params = [{transform_indices = @transform_0, window_bounds = array<i64: 128, 32>}, {transform_indices = @transform_1, window_bounds = array<i64: 128, 32>}, {transform_indices = @transform_2, window_bounds = array<i64: 128, 16>}, {transform_indices = @transform_3, window_bounds = array<i64: 128, 16>}, {transform_indices = @transform_4, window_bounds = array<i64: 128, 1>}, {transform_indices = @transform_5, window_bounds = array<i64: 1, 128>}, {transform_indices = @transform_6, window_bounds = array<i64: 128, 1>}, {transform_indices = @transform_7, window_bounds = array<i64: 1, 128>}, {transform_indices = @transform_8, window_bounds = array<i64: 8, 128>}]} {
    %c0_i32 = arith.constant 0 : i32
    %0 = arith.cmpi eq, %arg1, %c0_i32 : i32
    %1 = arith.extui %0 : i1 to i32
    %c0_i32_0 = arith.constant 0 : i32
    %2 = arith.cmpi ne, %1, %c0_i32_0 : i32
    scf.if %2 {
      %cst_31 = arith.constant 0.000000e+00 : f32
      %36 = vector.broadcast %cst_31 : f32 to vector<128x128xf32>
      %c0_32 = arith.constant 0 : index
      %c0_33 = arith.constant 0 : index
      %37 = vector.load %arg11[%c0_32, %c0_33] : memref<128x128xf32, #tpu.memory_space<vmem>>, vector<128x128xf32>
      tpu.vector_store %arg11[%c0_32, %c0_33], %36 {strides = array<i32>} : memref<128x128xf32, #tpu.memory_space<vmem>>, vector<128x128xf32>,
      %cst_34 = arith.constant 0.000000e+00 : f32
      %38 = vector.broadcast %cst_34 : f32 to vector<128x128xf32>
      %c0_35 = arith.constant 0 : index
      %c0_36 = arith.constant 0 : index
      %39 = vector.load %arg12[%c0_35, %c0_36] : memref<128x128xf32, #tpu.memory_space<vmem>>, vector<128x128xf32>
      tpu.vector_store %arg12[%c0_35, %c0_36], %38 {strides = array<i32>} : memref<128x128xf32, #tpu.memory_space<vmem>>, vector<128x128xf32>,
      %cst_37 = arith.constant 0.000000e+00 : f32
      %40 = vector.broadcast %cst_37 : f32 to vector<128x128xf32>
      %c0_38 = arith.constant 0 : index
      %c0_39 = arith.constant 0 : index
      %41 = vector.load %arg13[%c0_38, %c0_39] : memref<128x128xf32, #tpu.memory_space<vmem>>, vector<128x128xf32>
      tpu.vector_store %arg13[%c0_38, %c0_39], %40 {strides = array<i32>} : memref<128x128xf32, #tpu.memory_space<vmem>>, vector<128x128xf32>,
    } else {
    }
    %c0 = arith.constant 0 : index
    %c0_1 = arith.constant 0 : index
    %3 = vector.load %arg2[%c0, %c0_1] : memref<128x32xf32, #tpu.memory_space<vmem>>, vector<128x32xf32>
    %c0_2 = arith.constant 0 : index
    %c0_3 = arith.constant 0 : index
    %4 = vector.load %arg3[%c0_2, %c0_3] : memref<128x32xf32, #tpu.memory_space<vmem>>, vector<128x32xf32>
    %cst = arith.constant dense<0.000000e+00> : vector<128x128xf32>
    %5 = tpu.matmul %3, %4, %cst {dimension_numbers = #tpu.dot_dimension_numbers<[1], [1], [0], [0], [0, 0, 1, 0], [], []>} : vector<128x32xf32>, vector<128x32xf32>, vector<128x128xf32> -> vector<128x128xf32>
    %c0_4 = arith.constant 0 : index
    %c0_5 = arith.constant 0 : index
    %6 = vector.load %arg6[%c0_4, %c0_5] : memref<128x1xf32, #tpu.memory_space<vmem>>, vector<128x1xf32>
    %7 = vector.broadcast %6 : vector<128x1xf32> to vector<128x128xf32>
    %8 = arith.addf %5, %7 : vector<128x128xf32>
    %c0_6 = arith.constant 0 : index
    %c0_7 = arith.constant 0 : index
    %9 = vector.load %arg7[%c0_6, %c0_7] : memref<1x128xf32, #tpu.memory_space<vmem>>, vector<1x128xf32>
    %10 = vector.broadcast %9 : vector<1x128xf32> to vector<128x128xf32>
    %11 = arith.addf %8, %10 : vector<128x128xf32>
    %12 = math.exp %11 : vector<128x128xf32>
    %c0_8 = arith.constant 0 : index
    %c0_9 = arith.constant 0 : index
    %13 = vector.load %arg4[%c0_8, %c0_9] : memref<128x16xf32, #tpu.memory_space<vmem>>, vector<128x16xf32>
    %c0_10 = arith.constant 0 : index
    %c0_11 = arith.constant 0 : index
    %14 = vector.load %arg5[%c0_10, %c0_11] : memref<128x16xf32, #tpu.memory_space<vmem>>, vector<128x16xf32>
    %cst_12 = arith.constant dense<0.000000e+00> : vector<128x128xf32>
    %15 = tpu.matmul %13, %14, %cst_12 {dimension_numbers = #tpu.dot_dimension_numbers<[1], [1], [0], [0], [0, 0, 1, 0], [], []>} : vector<128x16xf32>, vector<128x16xf32>, vector<128x128xf32> -> vector<128x128xf32>
    %c0_13 = arith.constant 0 : index
    %c0_14 = arith.constant 0 : index
    %16 = vector.load %arg8[%c0_13, %c0_14] : memref<128x1xf32, #tpu.memory_space<vmem>>, vector<128x1xf32>
    %17 = vector.broadcast %16 : vector<128x1xf32> to vector<128x128xf32>
    %18 = arith.addf %15, %17 : vector<128x128xf32>
    %c0_15 = arith.constant 0 : index
    %c0_16 = arith.constant 0 : index
    %19 = vector.load %arg9[%c0_15, %c0_16] : memref<1x128xf32, #tpu.memory_space<vmem>>, vector<1x128xf32>
    %20 = vector.broadcast %19 : vector<1x128xf32> to vector<128x128xf32>
    %21 = arith.addf %18, %20 : vector<128x128xf32>
    %22 = math.exp %21 : vector<128x128xf32>
    %c0_17 = arith.constant 0 : index
    %c0_18 = arith.constant 0 : index
    %23 = vector.load %arg11[%c0_17, %c0_18] : memref<128x128xf32, #tpu.memory_space<vmem>>, vector<128x128xf32>
    %c0_19 = arith.constant 0 : index
    %c0_20 = arith.constant 0 : index
    %24 = vector.load %arg12[%c0_19, %c0_20] : memref<128x128xf32, #tpu.memory_space<vmem>>, vector<128x128xf32>
    %c0_21 = arith.constant 0 : index
    %c0_22 = arith.constant 0 : index
    %25 = vector.load %arg13[%c0_21, %c0_22] : memref<128x128xf32, #tpu.memory_space<vmem>>, vector<128x128xf32>
    %26 = arith.addf %23, %12 : vector<128x128xf32>
    %27 = arith.addf %24, %22 : vector<128x128xf32>
    %28 = arith.mulf %12, %22 : vector<128x128xf32>
    %29 = arith.addf %25, %28 : vector<128x128xf32>
    %c0_23 = arith.constant 0 : index
    %c0_24 = arith.constant 0 : index
    %30 = vector.load %arg11[%c0_23, %c0_24] : memref<128x128xf32, #tpu.memory_space<vmem>>, vector<128x128xf32>
    tpu.vector_store %arg11[%c0_23, %c0_24], %26 {strides = array<i32>} : memref<128x128xf32, #tpu.memory_space<vmem>>, vector<128x128xf32>,
    %c0_25 = arith.constant 0 : index
    %c0_26 = arith.constant 0 : index
    %31 = vector.load %arg12[%c0_25, %c0_26] : memref<128x128xf32, #tpu.memory_space<vmem>>, vector<128x128xf32>
    tpu.vector_store %arg12[%c0_25, %c0_26], %27 {strides = array<i32>} : memref<128x128xf32, #tpu.memory_space<vmem>>, vector<128x128xf32>,
    %c0_27 = arith.constant 0 : index
    %c0_28 = arith.constant 0 : index
    %32 = vector.load %arg13[%c0_27, %c0_28] : memref<128x128xf32, #tpu.memory_space<vmem>>, vector<128x128xf32>
    tpu.vector_store %arg13[%c0_27, %c0_28], %29 {strides = array<i32>} : memref<128x128xf32, #tpu.memory_space<vmem>>, vector<128x128xf32>,
    %c0_i32_29 = arith.constant 0 : i32
    %33 = arith.cmpi eq, %arg1, %c0_i32_29 : i32
    %34 = arith.extui %33 : i1 to i32
    %c0_i32_30 = arith.constant 0 : i32
    %35 = arith.cmpi ne, %34, %c0_i32_30 : i32
    scf.if %35 {
      %c0_31 = arith.constant 0 : index
      %c0_32 = arith.constant 0 : index
      %36 = vector.load %arg11[%c0_31, %c0_32] : memref<128x128xf32, #tpu.memory_space<vmem>>, vector<128x128xf32>
      %cst_33 = arith.constant dense<0.000000e+00> : vector<128xf32>
      %37 = vector.multi_reduction <add>, %36, %cst_33 [1] : vector<128x128xf32> to vector<128xf32>
      %38 = vector.shape_cast %37 : vector<128xf32> to vector<128x1xf32>
      %c0_34 = arith.constant 0 : index
      %c0_35 = arith.constant 0 : index
      %39 = vector.load %arg12[%c0_34, %c0_35] : memref<128x128xf32, #tpu.memory_space<vmem>>, vector<128x128xf32>
      %cst_36 = arith.constant dense<0.000000e+00> : vector<128xf32>
      %40 = vector.multi_reduction <add>, %39, %cst_36 [1] : vector<128x128xf32> to vector<128xf32>
      %41 = vector.shape_cast %40 : vector<128xf32> to vector<128x1xf32>
      %c0_37 = arith.constant 0 : index
      %c0_38 = arith.constant 0 : index
      %42 = vector.load %arg13[%c0_37, %c0_38] : memref<128x128xf32, #tpu.memory_space<vmem>>, vector<128x128xf32>
      %43 = vector.shape_cast %42 : vector<128x128xf32> to vector<1x128x128xf32>
      %cst_39 = arith.constant dense<0.000000e+00> : vector<1xf32>
      %44 = vector.multi_reduction <add>, %43, %cst_39 [1, 2] : vector<1x128x128xf32> to vector<1xf32>
      %45 = vector.shape_cast %44 : vector<1xf32> to vector<1x1x1xf32>
      %46 = vector.extract %45[0, 0, 0] : f32 from vector<1x1x1xf32>
      %47 = arith.mulf %38, %41 : vector<128x1xf32>
      %48 = vector.shape_cast %47 : vector<128x1xf32> to vector<1x128x1xf32>
      %cst_40 = arith.constant dense<0.000000e+00> : vector<1xf32>
      %49 = vector.multi_reduction <add>, %48, %cst_40 [1, 2] : vector<1x128x1xf32> to vector<1xf32>
      %50 = vector.shape_cast %49 : vector<1xf32> to vector<1x1x1xf32>
      %51 = vector.extract %50[0, 0, 0] : f32 from vector<1x1x1xf32>
      %52 = vector.shape_cast %38 : vector<128x1xf32> to vector<1x128x1xf32>
      %cst_41 = arith.constant dense<0.000000e+00> : vector<1xf32>
      %53 = vector.multi_reduction <add>, %52, %cst_41 [1, 2] : vector<1x128x1xf32> to vector<1xf32>
      %54 = vector.shape_cast %53 : vector<1xf32> to vector<1x1x1xf32>
      %55 = vector.extract %54[0, 0, 0] : f32 from vector<1x1x1xf32>
      %56 = vector.shape_cast %41 : vector<128x1xf32> to vector<1x128x1xf32>
      %cst_42 = arith.constant dense<0.000000e+00> : vector<1xf32>
      %57 = vector.multi_reduction <add>, %56, %cst_42 [1, 2] : vector<1x128x1xf32> to vector<1xf32>
      %58 = vector.shape_cast %57 : vector<1xf32> to vector<1x1x1xf32>
      %59 = vector.extract %58[0, 0, 0] : f32 from vector<1x1x1xf32>
      %60 = tpu.iota {dimensions = array<i32: 0>} : vector<8x128xi32>
      %c0_i32_43 = arith.constant 0 : i32
      %61 = vector.broadcast %c0_i32_43 : i32 to vector<8x128xi32>
      %62 = arith.cmpi eq, %60, %61 : vector<8x128xi32>
      %c1_i32 = arith.constant 1 : i32
      %63 = vector.broadcast %c1_i32 : i32 to vector<8x128xi32>
      %64 = arith.cmpi eq, %60, %63 : vector<8x128xi32>
      %c2_i32 = arith.constant 2 : i32
      %65 = vector.broadcast %c2_i32 : i32 to vector<8x128xi32>
      %66 = arith.cmpi eq, %60, %65 : vector<8x128xi32>
      %c3_i32 = arith.constant 3 : i32
      %67 = vector.broadcast %c3_i32 : i32 to vector<8x128xi32>
      %68 = arith.cmpi eq, %60, %67 : vector<8x128xi32>
      %cst_44 = arith.constant 0.000000e+00 : f32
      %69 = vector.broadcast %59 : f32 to vector<8x128xf32>
      %70 = vector.broadcast %cst_44 : f32 to vector<8x128xf32>
      %71 = arith.select %68, %69, %70 : vector<8x128xi1>, vector<8x128xf32>
      %72 = vector.broadcast %55 : f32 to vector<8x128xf32>
      %73 = arith.select %66, %72, %71 : vector<8x128xi1>, vector<8x128xf32>
      %74 = vector.broadcast %51 : f32 to vector<8x128xf32>
      %75 = arith.select %64, %74, %73 : vector<8x128xi1>, vector<8x128xf32>
      %76 = vector.broadcast %46 : f32 to vector<8x128xf32>
      %77 = arith.select %62, %76, %75 : vector<8x128xi1>, vector<8x128xf32>
      %c0_45 = arith.constant 0 : index
      %c0_46 = arith.constant 0 : index
      %78 = vector.load %arg10[%c0_45, %c0_46] : memref<8x128xf32, #tpu.memory_space<vmem>>, vector<8x128xf32>
      tpu.vector_store %arg10[%c0_45, %c0_46], %77 {strides = array<i32>} : memref<8x128xf32, #tpu.memory_space<vmem>>, vector<8x128xf32>,
    } else {
    }
    return
  }
  func.func @transform_0(%arg0: i32, %arg1: i32) -> (i32, i32) {
    %c0_i32 = arith.constant 0 : i32
    %c0_i32_0 = arith.constant 0 : i32
    return %arg0, %c0_i32 : i32, i32
  }
  func.func @transform_1(%arg0: i32, %arg1: i32) -> (i32, i32) {
    %c0_i32 = arith.constant 0 : i32
    %c0_i32_0 = arith.constant 0 : i32
    return %arg1, %c0_i32 : i32, i32
  }
  func.func @transform_2(%arg0: i32, %arg1: i32) -> (i32, i32) {
    %c0_i32 = arith.constant 0 : i32
    %c0_i32_0 = arith.constant 0 : i32
    return %arg0, %c0_i32 : i32, i32
  }
  func.func @transform_3(%arg0: i32, %arg1: i32) -> (i32, i32) {
    %c0_i32 = arith.constant 0 : i32
    %c0_i32_0 = arith.constant 0 : i32
    return %arg1, %c0_i32 : i32, i32
  }
  func.func @transform_4(%arg0: i32, %arg1: i32) -> (i32, i32) {
    %c0_i32 = arith.constant 0 : i32
    %c0_i32_0 = arith.constant 0 : i32
    return %arg0, %c0_i32 : i32, i32
  }
  func.func @transform_5(%arg0: i32, %arg1: i32) -> (i32, i32) {
    %c0_i32 = arith.constant 0 : i32
    %c0_i32_0 = arith.constant 0 : i32
    return %c0_i32, %arg1 : i32, i32
  }
  func.func @transform_6(%arg0: i32, %arg1: i32) -> (i32, i32) {
    %c0_i32 = arith.constant 0 : i32
    %c0_i32_0 = arith.constant 0 : i32
    return %arg0, %c0_i32 : i32, i32
  }
  func.func @transform_7(%arg0: i32, %arg1: i32) -> (i32, i32) {
    %c0_i32 = arith.constant 0 : i32
    %c0_i32_0 = arith.constant 0 : i32
    return %c0_i32, %arg1 : i32, i32
  }
  func.func @transform_8(%arg0: i32, %arg1: i32) -> (i32, i32) {
    %c0_i32 = arith.constant 0 : i32
    %c0_i32_0 = arith.constant 0 : i32
    return %arg0, %c0_i32 : i32, i32
  }
}

</mosaic_0001>

<llo_original>
// kernel: tpu_custom_call.1
$region0: #{tpu_custom_call.1}
  #allocation0 [shape = 'u32[]', space=smem, size = 0x4, offset = 0x4, fixed_abs, tag = 'smem constant byte address 0x4 - core index']
  #allocation1 [shape = 'u32[72,128]{1,0:T(1,128)}', space=vmem, size = 0x9000, scoped, tag = 'internal scratch']
  #allocation2 [shape = 'f32[128,128]{1,0:T(8,128)}', space=vmem, size = 0x10000, scoped, tag = 'scratch operand']
  #allocation3 [shape = 'f32[128,128]{1,0:T(8,128)}', space=vmem, size = 0x10000, scoped, tag = 'scratch operand']
  #allocation4 [shape = 'f32[128,128]{1,0:T(8,128)}', space=vmem, size = 0x10000, scoped, tag = 'scratch operand']
  %s0 = inlined_call_operand.vmem [shape: f32[128,32], index: 0, kind: input, shape index: {}]
  %s1 = inlined_call_operand.vmem [shape: f32[128,32], index: 1, kind: input, shape index: {}]
  %s2 = inlined_call_operand.vmem [shape: f32[128,16], index: 2, kind: input, shape index: {}]
  %s3 = inlined_call_operand.vmem [shape: f32[128,16], index: 3, kind: input, shape index: {}]
  %s4 = inlined_call_operand.vmem [shape: f32[128,1], index: 4, kind: input, shape index: {}]
  %s5 = inlined_call_operand.vmem [shape: f32[1,128], index: 5, kind: input, shape index: {}]
  %s6 = inlined_call_operand.vmem [shape: f32[128,1], index: 6, kind: input, shape index: {}]
  %s7 = inlined_call_operand.vmem [shape: f32[1,128], index: 7, kind: input, shape index: {}]
  %s8 = inlined_call_operand.hbm [shape: f32[8,128], index: 8, kind: output, shape index: {}]
  %s9 = sld [smem:[#allocation0]]
  $region50: #{tpu_custom_call.1} parent=0
    _
  %s11 = ssub.s32 1, %s9
  %s12 = scalar_select 0, %s11, %s9
  $region1: #{tpu_custom_call.1} parent=0
    #allocation5 [shape = 'u8[4096]{0}', space=vmem, size = 0x1000, scoped, tag = 'output window, operand 0, single buffered']
    #allocation6 [shape = 's32[1]{0}', space=sflag, size = 0x4, scoped, tag = 'scoped memory for tpu_custom_call.1']
    %13 = vsyncpa [#allocation6], 0
    // Predicated region
    $region2: #{tpu_custom_call.1} parent=1 // pred_check
      _
    $region3: #{tpu_custom_call.1} parent=1 // pred_check_branch
      %15 = sbr.rel (0) target = $region5
    $region4: #{tpu_custom_call.1} parent=1 // pred_region
      _
    $region5: #{tpu_custom_call.1} parent=1 // pred_fallthru
      _
    // Predicated region
    $region6: #{tpu_custom_call.1} parent=1 // pred_check
      _
    $region7: #{tpu_custom_call.1} parent=1 // pred_check_branch
      %17 = sbr.rel (0) target = $region9
    $region8: #{tpu_custom_call.1} parent=1 // pred_region
      _
    $region9: #{tpu_custom_call.1} parent=1 // pred_fallthru
      _
    // Predicated region
    $region10: #{tpu_custom_call.1} parent=1 // pred_check
      _
    $region11: #{tpu_custom_call.1} parent=1 // pred_check_branch
      %19 = sbr.rel (0) target = $region13
    $region12: #{tpu_custom_call.1} parent=1 // pred_region
      _
    $region13: #{tpu_custom_call.1} parent=1 // pred_fallthru
      _
    // Predicated region
    $region14: #{tpu_custom_call.1} parent=1 // pred_check
      _
    $region15: #{tpu_custom_call.1} parent=1 // pred_check_branch
      %21 = sbr.rel (0) target = $region17
    $region16: #{tpu_custom_call.1} parent=1 // pred_region
      _
    $region17: #{tpu_custom_call.1} parent=1 // pred_fallthru
      _
    // Predicated region
    $region18: #{tpu_custom_call.1} parent=1 // pred_check
      _
    $region19: #{tpu_custom_call.1} parent=1 // pred_check_branch
      %23 = sbr.rel (0) target = $region21
    $region20: #{tpu_custom_call.1} parent=1 // pred_region
      _
    $region21: #{tpu_custom_call.1} parent=1 // pred_fallthru
      _
    // Predicated region
    $region22: #{tpu_custom_call.1} parent=1 // pred_check
      _
    $region23: #{tpu_custom_call.1} parent=1 // pred_check_branch
      %25 = sbr.rel (0) target = $region25
    $region24: #{tpu_custom_call.1} parent=1 // pred_region
      _
    $region25: #{tpu_custom_call.1} parent=1 // pred_fallthru
      _
    // Predicated region
    $region26: #{tpu_custom_call.1} parent=1 // pred_check
      _
    $region27: #{tpu_custom_call.1} parent=1 // pred_check_branch
      %27 = sbr.rel (0) target = $region29
    $region28: #{tpu_custom_call.1} parent=1 // pred_region
      _
    $region29: #{tpu_custom_call.1} parent=1 // pred_fallthru
      _
    // Predicated region
    $region30: #{tpu_custom_call.1} parent=1 // pred_check
      _
    $region31: #{tpu_custom_call.1} parent=1 // pred_check_branch
      %29 = sbr.rel (0) target = $region33
    $region32: #{tpu_custom_call.1} parent=1 // pred_region
      _
    $region33: #{tpu_custom_call.1} parent=1 // pred_fallthru
      _
    %p30 = scmp.eq.s32.totalorder 0, 0
    // Predicated region
    $region34: #{tpu_custom_call.1} parent=1 // pred_check
      %p31 = pneg %p30
    $region35: #{tpu_custom_call.1} parent=1 // pred_check_branch
      %33 = sbr.rel (%p31) target = $region37
    $region36: #{tpu_custom_call.1} parent=1 // pred_region
      %34 = vst [vmem:[#allocation2] sm:$0xff] 0.0
      %35 = vst [vmem:[#allocation2 + $0x8] sm:$0xff] 0.0
      %36 = vst [vmem:[#allocation2 + $0x10] sm:$0xff] 0.0
      %37 = vst [vmem:[#allocation2 + $0x18] sm:$0xff] 0.0
      %38 = vst [vmem:[#allocation2 + $0x20] sm:$0xff] 0.0
      %39 = vst [vmem:[#allocation2 + $0x28] sm:$0xff] 0.0
      %40 = vst [vmem:[#allocation2 + $0x30] sm:$0xff] 0.0
      %41 = vst [vmem:[#allocation2 + $0x38] sm:$0xff] 0.0
      %42 = vst [vmem:[#allocation2 + $0x40] sm:$0xff] 0.0
      %43 = vst [vmem:[#allocation2 + $0x48] sm:$0xff] 0.0
      %44 = vst [vmem:[#allocation2 + $0x50] sm:$0xff] 0.0
      %45 = vst [vmem:[#allocation2 + $0x58] sm:$0xff] 0.0
      %46 = vst [vmem:[#allocation2 + $0x60] sm:$0xff] 0.0
      %47 = vst [vmem:[#allocation2 + $0x68] sm:$0xff] 0.0
      %48 = vst [vmem:[#allocation2 + $0x70] sm:$0xff] 0.0
      %49 = vst [vmem:[#allocation2 + $0x78] sm:$0xff] 0.0
      %50 = vst [vmem:[#allocation3] sm:$0xff] 0.0
      %51 = vst [vmem:[#allocation3 + $0x8] sm:$0xff] 0.0
      %52 = vst [vmem:[#allocation3 + $0x10] sm:$0xff] 0.0
      %53 = vst [vmem:[#allocation3 + $0x18] sm:$0xff] 0.0
      %54 = vst [vmem:[#allocation3 + $0x20] sm:$0xff] 0.0
      %55 = vst [vmem:[#allocation3 + $0x28] sm:$0xff] 0.0
      %56 = vst [vmem:[#allocation3 + $0x30] sm:$0xff] 0.0
      %57 = vst [vmem:[#allocation3 + $0x38] sm:$0xff] 0.0
      %58 = vst [vmem:[#allocation3 + $0x40] sm:$0xff] 0.0
      %59 = vst [vmem:[#allocation3 + $0x48] sm:$0xff] 0.0
      %60 = vst [vmem:[#allocation3 + $0x50] sm:$0xff] 0.0
      %61 = vst [vmem:[#allocation3 + $0x58] sm:$0xff] 0.0
      %62 = vst [vmem:[#allocation3 + $0x60] sm:$0xff] 0.0
      %63 = vst [vmem:[#allocation3 + $0x68] sm:$0xff] 0.0
      %64 = vst [vmem:[#allocation3 + $0x70] sm:$0xff] 0.0
      %65 = vst [vmem:[#allocation3 + $0x78] sm:$0xff] 0.0
      %66 = vst [vmem:[#allocation4] sm:$0xff] 0.0
      %67 = vst [vmem:[#allocation4 + $0x8] sm:$0xff] 0.0
      %68 = vst [vmem:[#allocation4 + $0x10] sm:$0xff] 0.0
      %69 = vst [vmem:[#allocation4 + $0x18] sm:$0xff] 0.0
      %70 = vst [vmem:[#allocation4 + $0x20] sm:$0xff] 0.0
      %71 = vst [vmem:[#allocation4 + $0x28] sm:$0xff] 0.0
      %72 = vst [vmem:[#allocation4 + $0x30] sm:$0xff] 0.0
      %73 = vst [vmem:[#allocation4 + $0x38] sm:$0xff] 0.0
      %74 = vst [vmem:[#allocation4 + $0x40] sm:$0xff] 0.0
      %75 = vst [vmem:[#allocation4 + $0x48] sm:$0xff] 0.0
      %76 = vst [vmem:[#allocation4 + $0x50] sm:$0xff] 0.0
      %77 = vst [vmem:[#allocation4 + $0x58] sm:$0xff] 0.0
      %78 = vst [vmem:[#allocation4 + $0x60] sm:$0xff] 0.0
      %79 = vst [vmem:[#allocation4 + $0x68] sm:$0xff] 0.0
      %80 = vst [vmem:[#allocation4 + $0x70] sm:$0xff] 0.0
      %81 = vst [vmem:[#allocation4 + $0x78] sm:$0xff] 0.0
    $region37: #{tpu_custom_call.1} parent=1 // pred_fallthru
      _
    %v82 = vld [vmem:[%s0] sm:$0xff]
    %v83 = vld [vmem:[%s0 + $0x8] sm:$0xff]
    %v84 = vld [vmem:[%s0 + $0x10] sm:$0xff]
    %v85 = vld [vmem:[%s0 + $0x18] sm:$0xff]
    %v86 = vld [vmem:[%s0 + $0x20] sm:$0xff]
    %v87 = vld [vmem:[%s0 + $0x28] sm:$0xff]
    %v88 = vld [vmem:[%s0 + $0x30] sm:$0xff]
    %v89 = vld [vmem:[%s0 + $0x38] sm:$0xff]
    %v90 = vld [vmem:[%s0 + $0x40] sm:$0xff]
    %v91 = vld [vmem:[%s0 + $0x48] sm:$0xff]
    %v92 = vld [vmem:[%s0 + $0x50] sm:$0xff]
    %v93 = vld [vmem:[%s0 + $0x58] sm:$0xff]
    %v94 = vld [vmem:[%s0 + $0x60] sm:$0xff]
    %v95 = vld [vmem:[%s0 + $0x68] sm:$0xff]
    %v96 = vld [vmem:[%s0 + $0x70] sm:$0xff]
    %v97 = vld [vmem:[%s0 + $0x78] sm:$0xff]
    %v98 = vld [vmem:[%s1] sm:$0xff]
    %v99 = vld [vmem:[%s1 + $0x8] sm:$0xff]
    %v100 = vld [vmem:[%s1 + $0x10] sm:$0xff]
    %v101 = vld [vmem:[%s1 + $0x18] sm:$0xff]
    %v102 = vld [vmem:[%s1 + $0x20] sm:$0xff]
    %v103 = vld [vmem:[%s1 + $0x28] sm:$0xff]
    %v104 = vld [vmem:[%s1 + $0x30] sm:$0xff]
    %v105 = vld [vmem:[%s1 + $0x38] sm:$0xff]
    %v106 = vld [vmem:[%s1 + $0x40] sm:$0xff]
    %v107 = vld [vmem:[%s1 + $0x48] sm:$0xff]
    %v108 = vld [vmem:[%s1 + $0x50] sm:$0xff]
    %v109 = vld [vmem:[%s1 + $0x58] sm:$0xff]
    %v110 = vld [vmem:[%s1 + $0x60] sm:$0xff]
    %v111 = vld [vmem:[%s1 + $0x68] sm:$0xff]
    %v112 = vld [vmem:[%s1 + $0x70] sm:$0xff]
    %v113 = vld [vmem:[%s1 + $0x78] sm:$0xff]
    %v114 = vld [vmem:[%s4] sm:$0xff]
    %v115 = vld [vmem:[%s4 + $0x8] sm:$0xff]
    %v116 = vld [vmem:[%s4 + $0x10] sm:$0xff]
    %v117 = vld [vmem:[%s4 + $0x18] sm:$0xff]
    %v118 = vld [vmem:[%s4 + $0x20] sm:$0xff]
    %v119 = vld [vmem:[%s4 + $0x28] sm:$0xff]
    %v120 = vld [vmem:[%s4 + $0x30] sm:$0xff]
    %v121 = vld [vmem:[%s4 + $0x38] sm:$0xff]
    %v122 = vld [vmem:[%s4 + $0x40] sm:$0xff]
    %v123 = vld [vmem:[%s4 + $0x48] sm:$0xff]
    %v124 = vld [vmem:[%s4 + $0x50] sm:$0xff]
    %v125 = vld [vmem:[%s4 + $0x58] sm:$0xff]
    %v126 = vld [vmem:[%s4 + $0x60] sm:$0xff]
    %v127 = vld [vmem:[%s4 + $0x68] sm:$0xff]
    %v128 = vld [vmem:[%s4 + $0x70] sm:$0xff]
    %v129 = vld [vmem:[%s4 + $0x78] sm:$0xff]
    %131 = vset.pattern.permute.xlu0 0
    %132 = vperm.xlu0 %131, %v114
    %v133 = vpop.permute.xlu0 %132
    %136 = vset.pattern.permute.xlu0 0
    %137 = vperm.xlu0 %136, %v115
    %v138 = vpop.permute.xlu0 %137
    %141 = vset.pattern.permute.xlu0 0
    %142 = vperm.xlu0 %141, %v116
    %v143 = vpop.permute.xlu0 %142
    %146 = vset.pattern.permute.xlu0 0
    %147 = vperm.xlu0 %146, %v117
    %v148 = vpop.permute.xlu0 %147
    %151 = vset.pattern.permute.xlu0 0
    %152 = vperm.xlu0 %151, %v118
    %v153 = vpop.permute.xlu0 %152
    %156 = vset.pattern.permute.xlu0 0
    %157 = vperm.xlu0 %156, %v119
    %v158 = vpop.permute.xlu0 %157
    %161 = vset.pattern.permute.xlu0 0
    %162 = vperm.xlu0 %161, %v120
    %v163 = vpop.permute.xlu0 %162
    %166 = vset.pattern.permute.xlu0 0
    %167 = vperm.xlu0 %166, %v121
    %v168 = vpop.permute.xlu0 %167
    %171 = vset.pattern.permute.xlu0 0
    %172 = vperm.xlu0 %171, %v122
    %v173 = vpop.permute.xlu0 %172
    %176 = vset.pattern.permute.xlu0 0
    %177 = vperm.xlu0 %176, %v123
    %v178 = vpop.permute.xlu0 %177
    %181 = vset.pattern.permute.xlu0 0
    %182 = vperm.xlu0 %181, %v124
    %v183 = vpop.permute.xlu0 %182
    %186 = vset.pattern.permute.xlu0 0
    %187 = vperm.xlu0 %186, %v125
    %v188 = vpop.permute.xlu0 %187
    %191 = vset.pattern.permute.xlu0 0
    %192 = vperm.xlu0 %191, %v126
    %v193 = vpop.permute.xlu0 %192
    %196 = vset.pattern.permute.xlu0 0
    %197 = vperm.xlu0 %196, %v127
    %v198 = vpop.permute.xlu0 %197
    %201 = vset.pattern.permute.xlu0 0
    %202 = vperm.xlu0 %201, %v128
    %v203 = vpop.permute.xlu0 %202
    %206 = vset.pattern.permute.xlu0 0
    %207 = vperm.xlu0 %206, %v129
    %v208 = vpop.permute.xlu0 %207
    %vm210 = vcmask 261120
    %v212 = vsel %vm210, %v82, 0
    %v215 = vsel %vm210, %v83, 0
    %v218 = vsel %vm210, %v84, 0
    %v221 = vsel %vm210, %v85, 0
    %v224 = vsel %vm210, %v86, 0
    %v227 = vsel %vm210, %v87, 0
    %v230 = vsel %vm210, %v88, 0
    %v233 = vsel %vm210, %v89, 0
    %v236 = vsel %vm210, %v90, 0
    %v239 = vsel %vm210, %v91, 0
    %v242 = vsel %vm210, %v92, 0
    %v245 = vsel %vm210, %v93, 0
    %v248 = vsel %vm210, %v94, 0
    %v251 = vsel %vm210, %v95, 0
    %v254 = vsel %vm210, %v96, 0
    %v257 = vsel %vm210, %v97, 0
    %v260 = vsel %vm210, %v98, 0
    %v263 = vsel %vm210, %v99, 0
    %v266 = vsel %vm210, %v100, 0
    %v269 = vsel %vm210, %v101, 0
    %v272 = vsel %vm210, %v102, 0
    %v275 = vsel %vm210, %v103, 0
    %v278 = vsel %vm210, %v104, 0
    %v281 = vsel %vm210, %v105, 0
    %v284 = vsel %vm210, %v106, 0
    %v287 = vsel %vm210, %v107, 0
    %v290 = vsel %vm210, %v108, 0
    %v293 = vsel %vm210, %v109, 0
    %v296 = vsel %vm210, %v110, 0
    %v299 = vsel %vm210, %v111, 0
    %v302 = vsel %vm210, %v112, 0
    %v305 = vsel %vm210, %v113, 0
    %307 = vmatpush.xpose.msra.mxu0 %v305
    %308 = vmatpush.xpose.msra.mxu0 %v302
    %309 = vmatpush.xpose.msra.mxu0 %v299
    %310 = vmatpush.xpose.msra.mxu0 %v296
    %311 = vmatpush.xpose.msra.mxu0 %v293
    %312 = vmatpush.xpose.msra.mxu0 %v290
    %313 = vmatpush.xpose.msra.mxu0 %v287
    %314 = vmatpush.xpose.msra.mxu0 %v284
    %315 = vmatpush.xpose.msra.mxu0 %v281
    %316 = vmatpush.xpose.msra.mxu0 %v278
    %317 = vmatpush.xpose.msra.mxu0 %v275
    %318 = vmatpush.xpose.msra.mxu0 %v272
    %319 = vmatpush.xpose.msra.mxu0 %v269
    %320 = vmatpush.xpose.msra.mxu0 %v266
    %321 = vmatpush.xpose.msra.mxu0 %v263
    %322 = vmatpush.xpose.msra.mxu0 %v260
    %323 = vmatmul.f32.gmra.mxu0 %v212
    %v324 = vpop.f32.mrf.mxu0
    %v325 = vadd.f32 %v133, %v324
    %326 = vmatmul.f32.gmra.mxu0 %v215
    %v327 = vpop.f32.mrf.mxu0
    %v328 = vadd.f32 %v138, %v327
    %329 = vmatmul.f32.gmra.mxu0 %v218
    %v330 = vpop.f32.mrf.mxu0
    %v331 = vadd.f32 %v143, %v330
    %332 = vmatmul.f32.gmra.mxu0 %v221
    %v333 = vpop.f32.mrf.mxu0
    %v334 = vadd.f32 %v148, %v333
    %335 = vmatmul.f32.gmra.mxu0 %v224
    %v336 = vpop.f32.mrf.mxu0
    %v337 = vadd.f32 %v153, %v336
    %338 = vmatmul.f32.gmra.mxu0 %v227
    %v339 = vpop.f32.mrf.mxu0
    %v340 = vadd.f32 %v158, %v339
    %341 = vmatmul.f32.gmra.mxu0 %v230
    %v342 = vpop.f32.mrf.mxu0
    %v343 = vadd.f32 %v163, %v342
    %344 = vmatmul.f32.gmra.mxu0 %v233
    %v345 = vpop.f32.mrf.mxu0
    %v346 = vadd.f32 %v168, %v345
    %347 = vmatmul.f32.gmra.mxu0 %v236
    %v348 = vpop.f32.mrf.mxu0
    %v349 = vadd.f32 %v173, %v348
    %350 = vmatmul.f32.gmra.mxu0 %v239
    %v351 = vpop.f32.mrf.mxu0
    %v352 = vadd.f32 %v178, %v351
    %353 = vmatmul.f32.gmra.mxu0 %v242
    %v354 = vpop.f32.mrf.mxu0
    %v355 = vadd.f32 %v183, %v354
    %356 = vmatmul.f32.gmra.mxu0 %v245
    %v357 = vpop.f32.mrf.mxu0
    %v358 = vadd.f32 %v188, %v357
    %359 = vmatmul.f32.gmra.mxu0 %v248
    %v360 = vpop.f32.mrf.mxu0
    %v361 = vadd.f32 %v193, %v360
    %362 = vmatmul.f32.gmra.mxu0 %v251
    %v363 = vpop.f32.mrf.mxu0
    %v364 = vadd.f32 %v198, %v363
    %365 = vmatmul.f32.gmra.mxu0 %v254
    %v366 = vpop.f32.mrf.mxu0
    %v367 = vadd.f32 %v203, %v366
    %368 = vmatmul.f32.gmra.mxu0 %v257
    %v369 = vpop.f32.mrf.mxu0
    %v370 = vadd.f32 %v208, %v369
    %371 = vdwg.mxu0
    %v372 = vld [vmem:[%s5] sm:$0x1]
    %v374 = vperm.slane %v372, 0
    %v376 = vadd.f32 %v325, %v374
    %v377 = vadd.f32 %v328, %v374
    %v378 = vadd.f32 %v331, %v374
    %v379 = vadd.f32 %v334, %v374
    %v380 = vadd.f32 %v337, %v374
    %v381 = vadd.f32 %v340, %v374
    %v382 = vadd.f32 %v343, %v374
    %v383 = vadd.f32 %v346, %v374
    %v384 = vadd.f32 %v349, %v374
    %v385 = vadd.f32 %v352, %v374
    %v386 = vadd.f32 %v355, %v374
    %v387 = vadd.f32 %v358, %v374
    %v388 = vadd.f32 %v361, %v374
    %v389 = vadd.f32 %v364, %v374
    %v390 = vadd.f32 %v367, %v374
    %v391 = vadd.f32 %v370, %v374
    %v392 = vmul.f32 %v376, 1.442695
    %v393 = vpow.pop %v392
    %v394 = vmul.f32 %v377, 1.442695
    %v395 = vpow.pop %v394
    %v396 = vmul.f32 %v378, 1.442695
    %v397 = vpow.pop %v396
    %v398 = vmul.f32 %v379, 1.442695
    %v399 = vpow.pop %v398
    %v400 = vmul.f32 %v380, 1.442695
    %v401 = vpow.pop %v400
    %v402 = vmul.f32 %v381, 1.442695
    %v403 = vpow.pop %v402
    %v404 = vmul.f32 %v382, 1.442695
    %v405 = vpow.pop %v404
    %v406 = vmul.f32 %v383, 1.442695
    %v407 = vpow.pop %v406
    %v408 = vmul.f32 %v384, 1.442695
    %v409 = vpow.pop %v408
    %v410 = vmul.f32 %v385, 1.442695
    %v411 = vpow.pop %v410
    %v412 = vmul.f32 %v386, 1.442695
    %v413 = vpow.pop %v412
    %v414 = vmul.f32 %v387, 1.442695
    %v415 = vpow.pop %v414
    %v416 = vmul.f32 %v388, 1.442695
    %v417 = vpow.pop %v416
    %v418 = vmul.f32 %v389, 1.442695
    %v419 = vpow.pop %v418
    %v420 = vmul.f32 %v390, 1.442695
    %v421 = vpow.pop %v420
    %v422 = vmul.f32 %v391, 1.442695
    %v423 = vpow.pop %v422
    %v424 = vld [vmem:[%s2] sm:$0xff]
    %v425 = vld [vmem:[%s2 + $0x8] sm:$0xff]
    %v426 = vld [vmem:[%s2 + $0x10] sm:$0xff]
    %v427 = vld [vmem:[%s2 + $0x18] sm:$0xff]
    %v428 = vld [vmem:[%s2 + $0x20] sm:$0xff]
    %v429 = vld [vmem:[%s2 + $0x28] sm:$0xff]
    %v430 = vld [vmem:[%s2 + $0x30] sm:$0xff]
    %v431 = vld [vmem:[%s2 + $0x38] sm:$0xff]
    %v432 = vld [vmem:[%s2 + $0x40] sm:$0xff]
    %v433 = vld [vmem:[%s2 + $0x48] sm:$0xff]
    %v434 = vld [vmem:[%s2 + $0x50] sm:$0xff]
    %v435 = vld [vmem:[%s2 + $0x58] sm:$0xff]
    %v436 = vld [vmem:[%s2 + $0x60] sm:$0xff]
    %v437 = vld [vmem:[%s2 + $0x68] sm:$0xff]
    %v438 = vld [vmem:[%s2 + $0x70] sm:$0xff]
    %v439 = vld [vmem:[%s2 + $0x78] sm:$0xff]
    %v440 = vld [vmem:[%s3] sm:$0xff]
    %v441 = vld [vmem:[%s3 + $0x8] sm:$0xff]
    %v442 = vld [vmem:[%s3 + $0x10] sm:$0xff]
    %v443 = vld [vmem:[%s3 + $0x18] sm:$0xff]
    %v444 = vld [vmem:[%s3 + $0x20] sm:$0xff]
    %v445 = vld [vmem:[%s3 + $0x28] sm:$0xff]
    %v446 = vld [vmem:[%s3 + $0x30] sm:$0xff]
    %v447 = vld [vmem:[%s3 + $0x38] sm:$0xff]
    %v448 = vld [vmem:[%s3 + $0x40] sm:$0xff]
    %v449 = vld [vmem:[%s3 + $0x48] sm:$0xff]
    %v450 = vld [vmem:[%s3 + $0x50] sm:$0xff]
    %v451 = vld [vmem:[%s3 + $0x58] sm:$0xff]
    %v452 = vld [vmem:[%s3 + $0x60] sm:$0xff]
    %v453 = vld [vmem:[%s3 + $0x68] sm:$0xff]
    %v454 = vld [vmem:[%s3 + $0x70] sm:$0xff]
    %v455 = vld [vmem:[%s3 + $0x78] sm:$0xff]
    %v456 = vld [vmem:[%s6] sm:$0xff]
    %v457 = vld [vmem:[%s6 + $0x8] sm:$0xff]
    %v458 = vld [vmem:[%s6 + $0x10] sm:$0xff]
    %v459 = vld [vmem:[%s6 + $0x18] sm:$0xff]
    %v460 = vld [vmem:[%s6 + $0x20] sm:$0xff]
    %v461 = vld [vmem:[%s6 + $0x28] sm:$0xff]
    %v462 = vld [vmem:[%s6 + $0x30] sm:$0xff]
    %v463 = vld [vmem:[%s6 + $0x38] sm:$0xff]
    %v464 = vld [vmem:[%s6 + $0x40] sm:$0xff]
    %v465 = vld [vmem:[%s6 + $0x48] sm:$0xff]
    %v466 = vld [vmem:[%s6 + $0x50] sm:$0xff]
    %v467 = vld [vmem:[%s6 + $0x58] sm:$0xff]
    %v468 = vld [vmem:[%s6 + $0x60] sm:$0xff]
    %v469 = vld [vmem:[%s6 + $0x68] sm:$0xff]
    %v470 = vld [vmem:[%s6 + $0x70] sm:$0xff]
    %v471 = vld [vmem:[%s6 + $0x78] sm:$0xff]
    %473 = vset.pattern.permute.xlu0 0
    %474 = vperm.xlu0 %473, %v456
    %v475 = vpop.permute.xlu0 %474
    %478 = vset.pattern.permute.xlu0 0
    %479 = vperm.xlu0 %478, %v457
    %v480 = vpop.permute.xlu0 %479
    %483 = vset.pattern.permute.xlu0 0
    %484 = vperm.xlu0 %483, %v458
    %v485 = vpop.permute.xlu0 %484
    %488 = vset.pattern.permute.xlu0 0
    %489 = vperm.xlu0 %488, %v459
    %v490 = vpop.permute.xlu0 %489
    %493 = vset.pattern.permute.xlu0 0
    %494 = vperm.xlu0 %493, %v460
    %v495 = vpop.permute.xlu0 %494
    %498 = vset.pattern.permute.xlu0 0
    %499 = vperm.xlu0 %498, %v461
    %v500 = vpop.permute.xlu0 %499
    %503 = vset.pattern.permute.xlu0 0
    %504 = vperm.xlu0 %503, %v462
    %v505 = vpop.permute.xlu0 %504
    %508 = vset.pattern.permute.xlu0 0
    %509 = vperm.xlu0 %508, %v463
    %v510 = vpop.permute.xlu0 %509
    %513 = vset.pattern.permute.xlu0 0
    %514 = vperm.xlu0 %513, %v464
    %v515 = vpop.permute.xlu0 %514
    %518 = vset.pattern.permute.xlu0 0
    %519 = vperm.xlu0 %518, %v465
    %v520 = vpop.permute.xlu0 %519
    %523 = vset.pattern.permute.xlu0 0
    %524 = vperm.xlu0 %523, %v466
    %v525 = vpop.permute.xlu0 %524
    %528 = vset.pattern.permute.xlu0 0
    %529 = vperm.xlu0 %528, %v467
    %v530 = vpop.permute.xlu0 %529
    %533 = vset.pattern.permute.xlu0 0
    %534 = vperm.xlu0 %533, %v468
    %v535 = vpop.permute.xlu0 %534
    %538 = vset.pattern.permute.xlu0 0
    %539 = vperm.xlu0 %538, %v469
    %v540 = vpop.permute.xlu0 %539
    %543 = vset.pattern.permute.xlu0 0
    %544 = vperm.xlu0 %543, %v470
    %v545 = vpop.permute.xlu0 %544
    %548 = vset.pattern.permute.xlu0 0
    %549 = vperm.xlu0 %548, %v471
    %v550 = vpop.permute.xlu0 %549
    %vm552 = vcmask 130048
    %v554 = vsel %vm552, %v424, 0
    %v557 = vsel %vm552, %v425, 0
    %v560 = vsel %vm552, %v426, 0
    %v563 = vsel %vm552, %v427, 0
    %v566 = vsel %vm552, %v428, 0
    %v569 = vsel %vm552, %v429, 0
    %v572 = vsel %vm552, %v430, 0
    %v575 = vsel %vm552, %v431, 0
    %v578 = vsel %vm552, %v432, 0
    %v581 = vsel %vm552, %v433, 0
    %v584 = vsel %vm552, %v434, 0
    %v587 = vsel %vm552, %v435, 0
    %v590 = vsel %vm552, %v436, 0
    %v593 = vsel %vm552, %v437, 0
    %v596 = vsel %vm552, %v438, 0
    %v599 = vsel %vm552, %v439, 0
    %v602 = vsel %vm552, %v440, 0
    %v605 = vsel %vm552, %v441, 0
    %v608 = vsel %vm552, %v442, 0
    %v611 = vsel %vm552, %v443, 0
    %v614 = vsel %vm552, %v444, 0
    %v617 = vsel %vm552, %v445, 0
    %v620 = vsel %vm552, %v446, 0
    %v623 = vsel %vm552, %v447, 0
    %v626 = vsel %vm552, %v448, 0
    %v629 = vsel %vm552, %v449, 0
    %v632 = vsel %vm552, %v450, 0
    %v635 = vsel %vm552, %v451, 0
    %v638 = vsel %vm552, %v452, 0
    %v641 = vsel %vm552, %v453, 0
    %v644 = vsel %vm552, %v454, 0
    %v647 = vsel %vm552, %v455, 0
    %649 = vmatpush.xpose.msra.mxu0 %v647
    %650 = vmatpush.xpose.msra.mxu0 %v644
    %651 = vmatpush.xpose.msra.mxu0 %v641
    %652 = vmatpush.xpose.msra.mxu0 %v638
    %653 = vmatpush.xpose.msra.mxu0 %v635
    %654 = vmatpush.xpose.msra.mxu0 %v632
    %655 = vmatpush.xpose.msra.mxu0 %v629
    %656 = vmatpush.xpose.msra.mxu0 %v626
    %657 = vmatpush.xpose.msra.mxu0 %v623
    %658 = vmatpush.xpose.msra.mxu0 %v620
    %659 = vmatpush.xpose.msra.mxu0 %v617
    %660 = vmatpush.xpose.msra.mxu0 %v614
    %661 = vmatpush.xpose.msra.mxu0 %v611
    %662 = vmatpush.xpose.msra.mxu0 %v608
    %663 = vmatpush.xpose.msra.mxu0 %v605
    %664 = vmatpush.xpose.msra.mxu0 %v602
    %665 = vmatmul.f32.gmra.mxu0 %v554
    %v666 = vpop.f32.mrf.mxu0
    %v667 = vadd.f32 %v475, %v666
    %668 = vmatmul.f32.gmra.mxu0 %v557
    %v669 = vpop.f32.mrf.mxu0
    %v670 = vadd.f32 %v480, %v669
    %671 = vmatmul.f32.gmra.mxu0 %v560
    %v672 = vpop.f32.mrf.mxu0
    %v673 = vadd.f32 %v485, %v672
    %674 = vmatmul.f32.gmra.mxu0 %v563
    %v675 = vpop.f32.mrf.mxu0
    %v676 = vadd.f32 %v490, %v675
    %677 = vmatmul.f32.gmra.mxu0 %v566
    %v678 = vpop.f32.mrf.mxu0
    %v679 = vadd.f32 %v495, %v678
    %680 = vmatmul.f32.gmra.mxu0 %v569
    %v681 = vpop.f32.mrf.mxu0
    %v682 = vadd.f32 %v500, %v681
    %683 = vmatmul.f32.gmra.mxu0 %v572
    %v684 = vpop.f32.mrf.mxu0
    %v685 = vadd.f32 %v505, %v684
    %686 = vmatmul.f32.gmra.mxu0 %v575
    %v687 = vpop.f32.mrf.mxu0
    %v688 = vadd.f32 %v510, %v687
    %689 = vmatmul.f32.gmra.mxu0 %v578
    %v690 = vpop.f32.mrf.mxu0
    %v691 = vadd.f32 %v515, %v690
    %692 = vmatmul.f32.gmra.mxu0 %v581
    %v693 = vpop.f32.mrf.mxu0
    %v694 = vadd.f32 %v520, %v693
    %695 = vmatmul.f32.gmra.mxu0 %v584
    %v696 = vpop.f32.mrf.mxu0
    %v697 = vadd.f32 %v525, %v696
    %698 = vmatmul.f32.gmra.mxu0 %v587
    %v699 = vpop.f32.mrf.mxu0
    %v700 = vadd.f32 %v530, %v699
    %701 = vmatmul.f32.gmra.mxu0 %v590
    %v702 = vpop.f32.mrf.mxu0
    %v703 = vadd.f32 %v535, %v702
    %704 = vmatmul.f32.gmra.mxu0 %v593
    %v705 = vpop.f32.mrf.mxu0
    %v706 = vadd.f32 %v540, %v705
    %707 = vmatmul.f32.gmra.mxu0 %v596
    %v708 = vpop.f32.mrf.mxu0
    %v709 = vadd.f32 %v545, %v708
    %710 = vmatmul.f32.gmra.mxu0 %v599
    %v711 = vpop.f32.mrf.mxu0
    %v712 = vadd.f32 %v550, %v711
    %713 = vdwg.mxu0
    %v714 = vld [vmem:[%s7] sm:$0x1]
    %v716 = vperm.slane %v714, 0
    %v718 = vadd.f32 %v667, %v716
    %v719 = vadd.f32 %v670, %v716
    %v720 = vadd.f32 %v673, %v716
    %v721 = vadd.f32 %v676, %v716
    %v722 = vadd.f32 %v679, %v716
    %v723 = vadd.f32 %v682, %v716
    %v724 = vadd.f32 %v685, %v716
    %v725 = vadd.f32 %v688, %v716
    %v726 = vadd.f32 %v691, %v716
    %v727 = vadd.f32 %v694, %v716
    %v728 = vadd.f32 %v697, %v716
    %v729 = vadd.f32 %v700, %v716
    %v730 = vadd.f32 %v703, %v716
    %v731 = vadd.f32 %v706, %v716
    %v732 = vadd.f32 %v709, %v716
    %v733 = vadd.f32 %v712, %v716
    %v734 = vmul.f32 %v718, 1.442695
    %v735 = vpow.pop %v734
    %v736 = vmul.f32 %v719, 1.442695
    %v737 = vpow.pop %v736
    %v738 = vmul.f32 %v720, 1.442695
    %v739 = vpow.pop %v738
    %v740 = vmul.f32 %v721, 1.442695
    %v741 = vpow.pop %v740
    %v742 = vmul.f32 %v722, 1.442695
    %v743 = vpow.pop %v742
    %v744 = vmul.f32 %v723, 1.442695
    %v745 = vpow.pop %v744
    %v746 = vmul.f32 %v724, 1.442695
    %v747 = vpow.pop %v746
    %v748 = vmul.f32 %v725, 1.442695
    %v749 = vpow.pop %v748
    %v750 = vmul.f32 %v726, 1.442695
    %v751 = vpow.pop %v750
    %v752 = vmul.f32 %v727, 1.442695
    %v753 = vpow.pop %v752
    %v754 = vmul.f32 %v728, 1.442695
    %v755 = vpow.pop %v754
    %v756 = vmul.f32 %v729, 1.442695
    %v757 = vpow.pop %v756
    %v758 = vmul.f32 %v730, 1.442695
    %v759 = vpow.pop %v758
    %v760 = vmul.f32 %v731, 1.442695
    %v761 = vpow.pop %v760
    %v762 = vmul.f32 %v732, 1.442695
    %v763 = vpow.pop %v762
    %v764 = vmul.f32 %v733, 1.442695
    %v765 = vpow.pop %v764
    %v766 = vld [vmem:[#allocation2] sm:$0xff]
    %v767 = vld [vmem:[#allocation2 + $0x8] sm:$0xff]
    %v768 = vld [vmem:[#allocation2 + $0x10] sm:$0xff]
    %v769 = vld [vmem:[#allocation2 + $0x18] sm:$0xff]
    %v770 = vld [vmem:[#allocation2 + $0x20] sm:$0xff]
    %v771 = vld [vmem:[#allocation2 + $0x28] sm:$0xff]
    %v772 = vld [vmem:[#allocation2 + $0x30] sm:$0xff]
    %v773 = vld [vmem:[#allocation2 + $0x38] sm:$0xff]
    %v774 = vld [vmem:[#allocation2 + $0x40] sm:$0xff]
    %v775 = vld [vmem:[#allocation2 + $0x48] sm:$0xff]
    %v776 = vld [vmem:[#allocation2 + $0x50] sm:$0xff]
    %v777 = vld [vmem:[#allocation2 + $0x58] sm:$0xff]
    %v778 = vld [vmem:[#allocation2 + $0x60] sm:$0xff]
    %v779 = vld [vmem:[#allocation2 + $0x68] sm:$0xff]
    %v780 = vld [vmem:[#allocation2 + $0x70] sm:$0xff]
    %v781 = vld [vmem:[#allocation2 + $0x78] sm:$0xff]
    %v782 = vld [vmem:[#allocation3] sm:$0xff]
    %v783 = vld [vmem:[#allocation3 + $0x8] sm:$0xff]
    %v784 = vld [vmem:[#allocation3 + $0x10] sm:$0xff]
    %v785 = vld [vmem:[#allocation3 + $0x18] sm:$0xff]
    %v786 = vld [vmem:[#allocation3 + $0x20] sm:$0xff]
    %v787 = vld [vmem:[#allocation3 + $0x28] sm:$0xff]
    %v788 = vld [vmem:[#allocation3 + $0x30] sm:$0xff]
    %v789 = vld [vmem:[#allocation3 + $0x38] sm:$0xff]
    %v790 = vld [vmem:[#allocation3 + $0x40] sm:$0xff]
    %v791 = vld [vmem:[#allocation3 + $0x48] sm:$0xff]
    %v792 = vld [vmem:[#allocation3 + $0x50] sm:$0xff]
    %v793 = vld [vmem:[#allocation3 + $0x58] sm:$0xff]
    %v794 = vld [vmem:[#allocation3 + $0x60] sm:$0xff]
    %v795 = vld [vmem:[#allocation3 + $0x68] sm:$0xff]
    %v796 = vld [vmem:[#allocation3 + $0x70] sm:$0xff]
    %v797 = vld [vmem:[#allocation3 + $0x78] sm:$0xff]
    %v798 = vld [vmem:[#allocation4] sm:$0xff]
    %v799 = vld [vmem:[#allocation4 + $0x8] sm:$0xff]
    %v800 = vld [vmem:[#allocation4 + $0x10] sm:$0xff]
    %v801 = vld [vmem:[#allocation4 + $0x18] sm:$0xff]
    %v802 = vld [vmem:[#allocation4 + $0x20] sm:$0xff]
    %v803 = vld [vmem:[#allocation4 + $0x28] sm:$0xff]
    %v804 = vld [vmem:[#allocation4 + $0x30] sm:$0xff]
    %v805 = vld [vmem:[#allocation4 + $0x38] sm:$0xff]
    %v806 = vld [vmem:[#allocation4 + $0x40] sm:$0xff]
    %v807 = vld [vmem:[#allocation4 + $0x48] sm:$0xff]
    %v808 = vld [vmem:[#allocation4 + $0x50] sm:$0xff]
    %v809 = vld [vmem:[#allocation4 + $0x58] sm:$0xff]
    %v810 = vld [vmem:[#allocation4 + $0x60] sm:$0xff]
    %v811 = vld [vmem:[#allocation4 + $0x68] sm:$0xff]
    %v812 = vld [vmem:[#allocation4 + $0x70] sm:$0xff]
    %v813 = vld [vmem:[#allocation4 + $0x78] sm:$0xff]
    %v814 = vadd.f32 %v766, %v393
    %v815 = vadd.f32 %v767, %v395
    %v816 = vadd.f32 %v768, %v397
    %v817 = vadd.f32 %v769, %v399
    %v818 = vadd.f32 %v770, %v401
    %v819 = vadd.f32 %v771, %v403
    %v820 = vadd.f32 %v772, %v405
    %v821 = vadd.f32 %v773, %v407
    %v822 = vadd.f32 %v774, %v409
    %v823 = vadd.f32 %v775, %v411
    %v824 = vadd.f32 %v776, %v413
    %v825 = vadd.f32 %v777, %v415
    %v826 = vadd.f32 %v778, %v417
    %v827 = vadd.f32 %v779, %v419
    %v828 = vadd.f32 %v780, %v421
    %v829 = vadd.f32 %v781, %v423
    %v830 = vadd.f32 %v782, %v735
    %v831 = vadd.f32 %v783, %v737
    %v832 = vadd.f32 %v784, %v739
    %v833 = vadd.f32 %v785, %v741
    %v834 = vadd.f32 %v786, %v743
    %v835 = vadd.f32 %v787, %v745
    %v836 = vadd.f32 %v788, %v747
    %v837 = vadd.f32 %v789, %v749
    %v838 = vadd.f32 %v790, %v751
    %v839 = vadd.f32 %v791, %v753
    %v840 = vadd.f32 %v792, %v755
    %v841 = vadd.f32 %v793, %v757
    %v842 = vadd.f32 %v794, %v759
    %v843 = vadd.f32 %v795, %v761
    %v844 = vadd.f32 %v796, %v763
    %v845 = vadd.f32 %v797, %v765
    %v846 = vmul.f32 %v393, %v735
    %v847 = vmul.f32 %v395, %v737
    %v848 = vmul.f32 %v397, %v739
    %v849 = vmul.f32 %v399, %v741
    %v850 = vmul.f32 %v401, %v743
    %v851 = vmul.f32 %v403, %v745
    %v852 = vmul.f32 %v405, %v747
    %v853 = vmul.f32 %v407, %v749
    %v854 = vmul.f32 %v409, %v751
    %v855 = vmul.f32 %v411, %v753
    %v856 = vmul.f32 %v413, %v755
    %v857 = vmul.f32 %v415, %v757
    %v858 = vmul.f32 %v417, %v759
    %v859 = vmul.f32 %v419, %v761
    %v860 = vmul.f32 %v421, %v763
    %v861 = vmul.f32 %v423, %v765
    %v862 = vadd.f32 %v798, %v846
    %v863 = vadd.f32 %v799, %v847
    %v864 = vadd.f32 %v800, %v848
    %v865 = vadd.f32 %v801, %v849
    %v866 = vadd.f32 %v802, %v850
    %v867 = vadd.f32 %v803, %v851
    %v868 = vadd.f32 %v804, %v852
    %v869 = vadd.f32 %v805, %v853
    %v870 = vadd.f32 %v806, %v854
    %v871 = vadd.f32 %v807, %v855
    %v872 = vadd.f32 %v808, %v856
    %v873 = vadd.f32 %v809, %v857
    %v874 = vadd.f32 %v810, %v858
    %v875 = vadd.f32 %v811, %v859
    %v876 = vadd.f32 %v812, %v860
    %v877 = vadd.f32 %v813, %v861
    %878 = vst [vmem:[#allocation2] sm:$0xff] %v814
    %879 = vst [vmem:[#allocation2 + $0x8] sm:$0xff] %v815
    %880 = vst [vmem:[#allocation2 + $0x10] sm:$0xff] %v816
    %881 = vst [vmem:[#allocation2 + $0x18] sm:$0xff] %v817
    %882 = vst [vmem:[#allocation2 + $0x20] sm:$0xff] %v818
    %883 = vst [vmem:[#allocation2 + $0x28] sm:$0xff] %v819
    %884 = vst [vmem:[#allocation2 + $0x30] sm:$0xff] %v820
    %885 = vst [vmem:[#allocation2 + $0x38] sm:$0xff] %v821
    %886 = vst [vmem:[#allocation2 + $0x40] sm:$0xff] %v822
    %887 = vst [vmem:[#allocation2 + $0x48] sm:$0xff] %v823
    %888 = vst [vmem:[#allocation2 + $0x50] sm:$0xff] %v824
    %889 = vst [vmem:[#allocation2 + $0x58] sm:$0xff] %v825
    %890 = vst [vmem:[#allocation2 + $0x60] sm:$0xff] %v826
    %891 = vst [vmem:[#allocation2 + $0x68] sm:$0xff] %v827
    %892 = vst [vmem:[#allocation2 + $0x70] sm:$0xff] %v828
    %893 = vst [vmem:[#allocation2 + $0x78] sm:$0xff] %v829
    %894 = vst [vmem:[#allocation3] sm:$0xff] %v830
    %895 = vst [vmem:[#allocation3 + $0x8] sm:$0xff] %v831
    %896 = vst [vmem:[#allocation3 + $0x10] sm:$0xff] %v832
    %897 = vst [vmem:[#allocation3 + $0x18] sm:$0xff] %v833
    %898 = vst [vmem:[#allocation3 + $0x20] sm:$0xff] %v834
    %899 = vst [vmem:[#allocation3 + $0x28] sm:$0xff] %v835
    %900 = vst [vmem:[#allocation3 + $0x30] sm:$0xff] %v836
    %901 = vst [vmem:[#allocation3 + $0x38] sm:$0xff] %v837
    %902 = vst [vmem:[#allocation3 + $0x40] sm:$0xff] %v838
    %903 = vst [vmem:[#allocation3 + $0x48] sm:$0xff] %v839
    %904 = vst [vmem:[#allocation3 + $0x50] sm:$0xff] %v840
    %905 = vst [vmem:[#allocation3 + $0x58] sm:$0xff] %v841
    %906 = vst [vmem:[#allocation3 + $0x60] sm:$0xff] %v842
    %907 = vst [vmem:[#allocation3 + $0x68] sm:$0xff] %v843
    %908 = vst [vmem:[#allocation3 + $0x70] sm:$0xff] %v844
    %909 = vst [vmem:[#allocation3 + $0x78] sm:$0xff] %v845
    %910 = vst [vmem:[#allocation4] sm:$0xff] %v862
    %911 = vst [vmem:[#allocation4 + $0x8] sm:$0xff] %v863
    %912 = vst [vmem:[#allocation4 + $0x10] sm:$0xff] %v864
    %913 = vst [vmem:[#allocation4 + $0x18] sm:$0xff] %v865
    %914 = vst [vmem:[#allocation4 + $0x20] sm:$0xff] %v866
    %915 = vst [vmem:[#allocation4 + $0x28] sm:$0xff] %v867
    %916 = vst [vmem:[#allocation4 + $0x30] sm:$0xff] %v868
    %917 = vst [vmem:[#allocation4 + $0x38] sm:$0xff] %v869
    %918 = vst [vmem:[#allocation4 + $0x40] sm:$0xff] %v870
    %919 = vst [vmem:[#allocation4 + $0x48] sm:$0xff] %v871
    %920 = vst [vmem:[#allocation4 + $0x50] sm:$0xff] %v872
    %921 = vst [vmem:[#allocation4 + $0x58] sm:$0xff] %v873
    %922 = vst [vmem:[#allocation4 + $0x60] sm:$0xff] %v874
    %923 = vst [vmem:[#allocation4 + $0x68] sm:$0xff] %v875
    %924 = vst [vmem:[#allocation4 + $0x70] sm:$0xff] %v876
    %925 = vst [vmem:[#allocation4 + $0x78] sm:$0xff] %v877
    // Predicated region
    $region38: #{tpu_custom_call.1} parent=1 // pred_check
      %p926 = pneg %p30
    $region39: #{tpu_custom_call.1} parent=1 // pred_check_branch
      %928 = sbr.rel (%p926) target = $region41
    $region40: #{tpu_custom_call.1} parent=1 // pred_region
      %v929 = vld [vmem:[#allocation2] sm:$0xff]
      %v930 = vld [vmem:[#allocation2 + $0x8] sm:$0xff]
      %v931 = vld [vmem:[#allocation2 + $0x10] sm:$0xff]
      %v932 = vld [vmem:[#allocation2 + $0x18] sm:$0xff]
      %v933 = vld [vmem:[#allocation2 + $0x20] sm:$0xff]
      %v934 = vld [vmem:[#allocation2 + $0x28] sm:$0xff]
      %v935 = vld [vmem:[#allocation2 + $0x30] sm:$0xff]
      %v936 = vld [vmem:[#allocation2 + $0x38] sm:$0xff]
      %v937 = vld [vmem:[#allocation2 + $0x40] sm:$0xff]
      %v938 = vld [vmem:[#allocation2 + $0x48] sm:$0xff]
      %v939 = vld [vmem:[#allocation2 + $0x50] sm:$0xff]
      %v940 = vld [vmem:[#allocation2 + $0x58] sm:$0xff]
      %v941 = vld [vmem:[#allocation2 + $0x60] sm:$0xff]
      %v942 = vld [vmem:[#allocation2 + $0x68] sm:$0xff]
      %v943 = vld [vmem:[#allocation2 + $0x70] sm:$0xff]
      %v944 = vld [vmem:[#allocation2 + $0x78] sm:$0xff]
      %945 = vadd.xlane.f32.xlu0 %v929
      %v946 = vpop.xlane.xlu0 %945
      %947 = vadd.xlane.f32.xlu0 %v930
      %v948 = vpop.xlane.xlu0 %947
      %949 = vadd.xlane.f32.xlu0 %v931
      %v950 = vpop.xlane.xlu0 %949
      %951 = vadd.xlane.f32.xlu0 %v932
      %v952 = vpop.xlane.xlu0 %951
      %953 = vadd.xlane.f32.xlu0 %v933
      %v954 = vpop.xlane.xlu0 %953
      %955 = vadd.xlane.f32.xlu0 %v934
      %v956 = vpop.xlane.xlu0 %955
      %957 = vadd.xlane.f32.xlu0 %v935
      %v958 = vpop.xlane.xlu0 %957
      %959 = vadd.xlane.f32.xlu0 %v936
      %v960 = vpop.xlane.xlu0 %959
      %961 = vadd.xlane.f32.xlu0 %v937
      %v962 = vpop.xlane.xlu0 %961
      %963 = vadd.xlane.f32.xlu0 %v938
      %v964 = vpop.xlane.xlu0 %963
      %965 = vadd.xlane.f32.xlu0 %v939
      %v966 = vpop.xlane.xlu0 %965
      %967 = vadd.xlane.f32.xlu0 %v940
      %v968 = vpop.xlane.xlu0 %967
      %969 = vadd.xlane.f32.xlu0 %v941
      %v970 = vpop.xlane.xlu0 %969
      %971 = vadd.xlane.f32.xlu0 %v942
      %v972 = vpop.xlane.xlu0 %971
      %973 = vadd.xlane.f32.xlu0 %v943
      %v974 = vpop.xlane.xlu0 %973
      %975 = vadd.xlane.f32.xlu0 %v944
      %v976 = vpop.xlane.xlu0 %975
      %v977 = vld [vmem:[#allocation3] sm:$0xff]
      %v978 = vld [vmem:[#allocation3 + $0x8] sm:$0xff]
      %v979 = vld [vmem:[#allocation3 + $0x10] sm:$0xff]
      %v980 = vld [vmem:[#allocation3 + $0x18] sm:$0xff]
      %v981 = vld [vmem:[#allocation3 + $0x20] sm:$0xff]
      %v982 = vld [vmem:[#allocation3 + $0x28] sm:$0xff]
      %v983 = vld [vmem:[#allocation3 + $0x30] sm:$0xff]
      %v984 = vld [vmem:[#allocation3 + $0x38] sm:$0xff]
      %v985 = vld [vmem:[#allocation3 + $0x40] sm:$0xff]
      %v986 = vld [vmem:[#allocation3 + $0x48] sm:$0xff]
      %v987 = vld [vmem:[#allocation3 + $0x50] sm:$0xff]
      %v988 = vld [vmem:[#allocation3 + $0x58] sm:$0xff]
      %v989 = vld [vmem:[#allocation3 + $0x60] sm:$0xff]
      %v990 = vld [vmem:[#allocation3 + $0x68] sm:$0xff]
      %v991 = vld [vmem:[#allocation3 + $0x70] sm:$0xff]
      %v992 = vld [vmem:[#allocation3 + $0x78] sm:$0xff]
      %993 = vadd.xlane.f32.xlu0 %v977
      %v994 = vpop.xlane.xlu0 %993
      %995 = vadd.xlane.f32.xlu0 %v978
      %v996 = vpop.xlane.xlu0 %995
      %997 = vadd.xlane.f32.xlu0 %v979
      %v998 = vpop.xlane.xlu0 %997
      %999 = vadd.xlane.f32.xlu0 %v980
      %v1000 = vpop.xlane.xlu0 %999
      %1001 = vadd.xlane.f32.xlu0 %v981
      %v1002 = vpop.xlane.xlu0 %1001
      %1003 = vadd.xlane.f32.xlu0 %v982
      %v1004 = vpop.xlane.xlu0 %1003
      %1005 = vadd.xlane.f32.xlu0 %v983
      %v1006 = vpop.xlane.xlu0 %1005
      %1007 = vadd.xlane.f32.xlu0 %v984
      %v1008 = vpop.xlane.xlu0 %1007
      %1009 = vadd.xlane.f32.xlu0 %v985
      %v1010 = vpop.xlane.xlu0 %1009
      %1011 = vadd.xlane.f32.xlu0 %v986
      %v1012 = vpop.xlane.xlu0 %1011
      %1013 = vadd.xlane.f32.xlu0 %v987
      %v1014 = vpop.xlane.xlu0 %1013
      %1015 = vadd.xlane.f32.xlu0 %v988
      %v1016 = vpop.xlane.xlu0 %1015
      %1017 = vadd.xlane.f32.xlu0 %v989
      %v1018 = vpop.xlane.xlu0 %1017
      %1019 = vadd.xlane.f32.xlu0 %v990
      %v1020 = vpop.xlane.xlu0 %1019
      %1021 = vadd.xlane.f32.xlu0 %v991
      %v1022 = vpop.xlane.xlu0 %1021
      %1023 = vadd.xlane.f32.xlu0 %v992
      %v1024 = vpop.xlane.xlu0 %1023
      %v1025 = vld [vmem:[#allocation4] sm:$0xff]
      %v1026 = vld [vmem:[#allocation4 + $0x8] sm:$0xff]
      %v1027 = vld [vmem:[#allocation4 + $0x10] sm:$0xff]
      %v1028 = vld [vmem:[#allocation4 + $0x18] sm:$0xff]
      %v1029 = vld [vmem:[#allocation4 + $0x20] sm:$0xff]
      %v1030 = vld [vmem:[#allocation4 + $0x28] sm:$0xff]
      %v1031 = vld [vmem:[#allocation4 + $0x30] sm:$0xff]
      %v1032 = vld [vmem:[#allocation4 + $0x38] sm:$0xff]
      %v1033 = vld [vmem:[#allocation4 + $0x40] sm:$0xff]
      %v1034 = vld [vmem:[#allocation4 + $0x48] sm:$0xff]
      %v1035 = vld [vmem:[#allocation4 + $0x50] sm:$0xff]
      %v1036 = vld [vmem:[#allocation4 + $0x58] sm:$0xff]
      %v1037 = vld [vmem:[#allocation4 + $0x60] sm:$0xff]
      %v1038 = vld [vmem:[#allocation4 + $0x68] sm:$0xff]
      %v1039 = vld [vmem:[#allocation4 + $0x70] sm:$0xff]
      %v1040 = vld [vmem:[#allocation4 + $0x78] sm:$0xff]
      %v1041 = vadd.f32 %v1025, %v1026
      %v1042 = vadd.f32 %v1041, %v1027
      %v1043 = vadd.f32 %v1042, %v1028
      %v1044 = vadd.f32 %v1043, %v1029
      %v1045 = vadd.f32 %v1044, %v1030
      %v1046 = vadd.f32 %v1045, %v1031
      %v1047 = vadd.f32 %v1046, %v1032
      %v1048 = vadd.f32 %v1047, %v1033
      %v1049 = vadd.f32 %v1048, %v1034
      %v1050 = vadd.f32 %v1049, %v1035
      %v1051 = vadd.f32 %v1050, %v1036
      %v1052 = vadd.f32 %v1051, %v1037
      %v1053 = vadd.f32 %v1052, %v1038
      %v1054 = vadd.f32 %v1053, %v1039
      %v1055 = vadd.f32 %v1054, %v1040
      %1056 = vadd.xlane.f32.xlu0 %v1055
      %v1057 = vpop.xlane.xlu0 %1056
      %v1058 = vrot.slane %v1057, 4
      %v1059 = vadd.f32 %v1057, %v1058
      %v1060 = vrot.slane %v1059, 2
      %v1061 = vadd.f32 %v1059, %v1060
      %v1062 = vrot.slane %v1061, 1
      %v1063 = vadd.f32 %v1061, %v1062
      %s1064 = vtos %v1063
      %v1065 = vmul.f32 %v946, %v994
      %v1066 = vmul.f32 %v948, %v996
      %v1067 = vmul.f32 %v950, %v998
      %v1068 = vmul.f32 %v952, %v1000
      %v1069 = vmul.f32 %v954, %v1002
      %v1070 = vmul.f32 %v956, %v1004
      %v1071 = vmul.f32 %v958, %v1006
      %v1072 = vmul.f32 %v960, %v1008
      %v1073 = vmul.f32 %v962, %v1010
      %v1074 = vmul.f32 %v964, %v1012
      %v1075 = vmul.f32 %v966, %v1014
      %v1076 = vmul.f32 %v968, %v1016
      %v1077 = vmul.f32 %v970, %v1018
      %v1078 = vmul.f32 %v972, %v1020
      %v1079 = vmul.f32 %v974, %v1022
      %v1080 = vmul.f32 %v976, %v1024
      %vm1081 = vcmask 7168
      %v1082 = vsel %vm1081, %v1065, 0.0
      %v1083 = vsel %vm1081, %v1066, 0.0
      %v1084 = vadd.f32 %v1082, %v1083
      %v1085 = vsel %vm1081, %v1067, 0.0
      %v1086 = vadd.f32 %v1084, %v1085
      %v1087 = vsel %vm1081, %v1068, 0.0
      %v1088 = vadd.f32 %v1086, %v1087
      %v1089 = vsel %vm1081, %v1069, 0.0
      %v1090 = vadd.f32 %v1088, %v1089
      %v1091 = vsel %vm1081, %v1070, 0.0
      %v1092 = vadd.f32 %v1090, %v1091
      %v1093 = vsel %vm1081, %v1071, 0.0
      %v1094 = vadd.f32 %v1092, %v1093
      %v1095 = vsel %vm1081, %v1072, 0.0
      %v1096 = vadd.f32 %v1094, %v1095
      %v1097 = vsel %vm1081, %v1073, 0.0
      %v1098 = vadd.f32 %v1096, %v1097
      %v1099 = vsel %vm1081, %v1074, 0.0
      %v1100 = vadd.f32 %v1098, %v1099
      %v1101 = vsel %vm1081, %v1075, 0.0
      %v1102 = vadd.f32 %v1100, %v1101
      %v1103 = vsel %vm1081, %v1076, 0.0
      %v1104 = vadd.f32 %v1102, %v1103
      %v1105 = vsel %vm1081, %v1077, 0.0
      %v1106 = vadd.f32 %v1104, %v1105
      %v1107 = vsel %vm1081, %v1078, 0.0
      %v1108 = vadd.f32 %v1106, %v1107
      %v1109 = vsel %vm1081, %v1079, 0.0
      %v1110 = vadd.f32 %v1108, %v1109
      %v1111 = vsel %vm1081, %v1080, 0.0
      %v1112 = vadd.f32 %v1110, %v1111
      %1113 = vadd.xlane.f32.xlu0 %v1112
      %v1114 = vpop.xlane.xlu0 %1113
      %v1115 = vrot.slane %v1114, 4
      %v1116 = vadd.f32 %v1114, %v1115
      %v1117 = vrot.slane %v1116, 2
      %v1118 = vadd.f32 %v1116, %v1117
      %v1119 = vrot.slane %v1118, 1
      %v1120 = vadd.f32 %v1118, %v1119
      %s1121 = vtos %v1120
      %v1122 = vsel %vm1081, %v946, 0.0
      %v1123 = vsel %vm1081, %v948, 0.0
      %v1124 = vadd.f32 %v1122, %v1123
      %v1125 = vsel %vm1081, %v950, 0.0
      %v1126 = vadd.f32 %v1124, %v1125
      %v1127 = vsel %vm1081, %v952, 0.0
      %v1128 = vadd.f32 %v1126, %v1127
      %v1129 = vsel %vm1081, %v954, 0.0
      %v1130 = vadd.f32 %v1128, %v1129
      %v1131 = vsel %vm1081, %v956, 0.0
      %v1132 = vadd.f32 %v1130, %v1131
      %v1133 = vsel %vm1081, %v958, 0.0
      %v1134 = vadd.f32 %v1132, %v1133
      %v1135 = vsel %vm1081, %v960, 0.0
      %v1136 = vadd.f32 %v1134, %v1135
      %v1137 = vsel %vm1081, %v962, 0.0
      %v1138 = vadd.f32 %v1136, %v1137
      %v1139 = vsel %vm1081, %v964, 0.0
      %v1140 = vadd.f32 %v1138, %v1139
      %v1141 = vsel %vm1081, %v966, 0.0
      %v1142 = vadd.f32 %v1140, %v1141
      %v1143 = vsel %vm1081, %v968, 0.0
      %v1144 = vadd.f32 %v1142, %v1143
      %v1145 = vsel %vm1081, %v970, 0.0
      %v1146 = vadd.f32 %v1144, %v1145
      %v1147 = vsel %vm1081, %v972, 0.0
      %v1148 = vadd.f32 %v1146, %v1147
      %v1149 = vsel %vm1081, %v974, 0.0
      %v1150 = vadd.f32 %v1148, %v1149
      %v1151 = vsel %vm1081, %v976, 0.0
      %v1152 = vadd.f32 %v1150, %v1151
      %1153 = vadd.xlane.f32.xlu0 %v1152
      %v1154 = vpop.xlane.xlu0 %1153
      %v1155 = vrot.slane %v1154, 4
      %v1156 = vadd.f32 %v1154, %v1155
      %v1157 = vrot.slane %v1156, 2
      %v1158 = vadd.f32 %v1156, %v1157
      %v1159 = vrot.slane %v1158, 1
      %v1160 = vadd.f32 %v1158, %v1159
      %s1161 = vtos %v1160
      %v1162 = vsel %vm1081, %v994, 0.0
      %v1163 = vsel %vm1081, %v996, 0.0
      %v1164 = vadd.f32 %v1162, %v1163
      %v1165 = vsel %vm1081, %v998, 0.0
      %v1166 = vadd.f32 %v1164, %v1165
      %v1167 = vsel %vm1081, %v1000, 0.0
      %v1168 = vadd.f32 %v1166, %v1167
      %v1169 = vsel %vm1081, %v1002, 0.0
      %v1170 = vadd.f32 %v1168, %v1169
      %v1171 = vsel %vm1081, %v1004, 0.0
      %v1172 = vadd.f32 %v1170, %v1171
      %v1173 = vsel %vm1081, %v1006, 0.0
      %v1174 = vadd.f32 %v1172, %v1173
      %v1175 = vsel %vm1081, %v1008, 0.0
      %v1176 = vadd.f32 %v1174, %v1175
      %v1177 = vsel %vm1081, %v1010, 0.0
      %v1178 = vadd.f32 %v1176, %v1177
      %v1179 = vsel %vm1081, %v1012, 0.0
      %v1180 = vadd.f32 %v1178, %v1179
      %v1181 = vsel %vm1081, %v1014, 0.0
      %v1182 = vadd.f32 %v1180, %v1181
      %v1183 = vsel %vm1081, %v1016, 0.0
      %v1184 = vadd.f32 %v1182, %v1183
      %v1185 = vsel %vm1081, %v1018, 0.0
      %v1186 = vadd.f32 %v1184, %v1185
      %v1187 = vsel %vm1081, %v1020, 0.0
      %v1188 = vadd.f32 %v1186, %v1187
      %v1189 = vsel %vm1081, %v1022, 0.0
      %v1190 = vadd.f32 %v1188, %v1189
      %v1191 = vsel %vm1081, %v1024, 0.0
      %v1192 = vadd.f32 %v1190, %v1191
      %1193 = vadd.xlane.f32.xlu0 %v1192
      %v1194 = vpop.xlane.xlu0 %1193
      %v1195 = vrot.slane %v1194, 4
      %v1196 = vadd.f32 %v1194, %v1195
      %v1197 = vrot.slane %v1196, 2
      %v1198 = vadd.f32 %v1196, %v1197
      %v1199 = vrot.slane %v1198, 1
      %v1200 = vadd.f32 %v1198, %v1199
      %s1201 = vtos %v1200
      %v1202 = vlaneseq
      %v1203 = vshrl.u32 %v1202, 7
      %vm1204 = vcmp.eq.s32.totalorder %v1203, 0
      %vm1205 = vcmp.eq.s32.totalorder %v1203, 1
      %vm1206 = vcmp.eq.s32.totalorder %v1203, 2
      %vm1207 = vcmp.eq.s32.totalorder %v1203, 3
      %v1208 = vstv %s1201
      %v1209 = vsel %vm1207, %v1208, 0.0
      %v1210 = vstv %s1161
      %v1211 = vsel %vm1206, %v1210, %v1209
      %v1212 = vstv %s1121
      %v1213 = vsel %vm1205, %v1212, %v1211
      %v1214 = vstv %s1064
      %v1215 = vsel %vm1204, %v1214, %v1213
      %1216 = vst [vmem:[#allocation5] sm:$0xff] %v1215
    $region41: #{tpu_custom_call.1} parent=1 // pred_fallthru
      _
    // Predicated region
    $region42: #{tpu_custom_call.1} parent=1 // pred_check
      _
    $region43: #{tpu_custom_call.1} parent=1 // pred_check_branch
      %1218 = sbr.rel (0) target = $region45
    $region44: #{tpu_custom_call.1} parent=1 // pred_region
      %1220 = vsyncadd [#allocation6], 0
      %s1222 = sshll.u32 [#allocation5], 4
      %s1223 = int_to_ptr.vmem [resolvable:$true] %s1222
      %s1224 = sshll.u32 %s8, 4
      %s1225 = int_to_ptr.hbm [resolvable:$true] %s1224
      %1227 = dma.vmem_to_hbm [thread:$0]  %s1223, 128, %s1225, [#allocation6]
    $region45: #{tpu_custom_call.1} parent=1 // pred_fallthru
      _
    // Predicated region
    $region46: #{tpu_custom_call.1} parent=1 // pred_check
      _
    $region47: #{tpu_custom_call.1} parent=1 // pred_check_branch
      %1229 = sbr.rel (0) target = $region49
    $region48: #{tpu_custom_call.1} parent=1 // pred_region
      %1231 = dma.done [#allocation6], 128
    $region49: #{tpu_custom_call.1} parent=1 // pred_fallthru
      _
    %1232 = vsyncpa [#allocation6], 1

</llo_original>
